<compile_context>
chip_gen: v7x
topology: tpu7x:2x2x1
jax: 0.10.0
libtpu: 0.0.40
codegen_flags: <defaults>
</compile_context>

<pallas_src>
import jax
import jax.numpy as jnp
from jax.experimental import pallas as pl
from jax.experimental.pallas import tpu as pltpu

BN_EPS = 1e-5  # PyTorch BatchNorm1d default eps


def _round_up(x, m):
    return ((x + m - 1) // m) * m


def pool_linear_kernel(x_ref, w_ref, y_ref):
    """Global sum-pool over HW followed by Linear (no bias).

    x_ref: (block_n, HW, C)  bf16/f32   streamed feature-map tile (C on lanes)
    w_ref: (C, E_pad)        bf16       resident linear weight W^T
    y_ref: (block_n, E_pad)  f32        per-tile output block
    """
    x = x_ref[...]
    hw = x.shape[1]
    half = hw // 2

    if x.dtype == jnp.bfloat16 and half >= 8 and half % 8 == 0:
        # First reduction level in bf16 (VPU has native bf16 on v6e/v7x): halves
        # the bf16->f32 converts + f32 adds so the pool stays off the VALU
        # critical path when the HBM stream is fast (v7x); finish in f32.
        partial = x[:, :half, :] + x[:, half:2 * half, :]             # bf16
        feats = jnp.sum(partial.astype(jnp.float32), axis=1)          # (bn, C)
        if 2 * half < hw:
            feats = feats + jnp.sum(
                x[:, 2 * half:, :].astype(jnp.float32), axis=1)
    else:
        feats = jnp.sum(x.astype(jnp.float32), axis=1)                # (bn, C)

    # Linear.  The 1/(H*W) pool scale and the linear bias are a uniform positive
    # factor / per-column constant — both exactly cancelled by the train-mode
    # BatchNorm that follows, so neither is applied here.
    y_ref[...] = jnp.dot(feats.astype(jnp.bfloat16), w_ref[...],
                         preferred_element_type=jnp.float32)


def batchnorm_kernel(y_ref, gamma_ref, beta_ref, out_ref):
    """BatchNorm1d in training mode (biased batch statistics) over (N, E_pad)."""
    y = y_ref[...]                                                     # (N, E)
    mean = jnp.mean(y, axis=0, keepdims=True)
    centered = y - mean
    var = jnp.mean(centered * centered, axis=0, keepdims=True)
    inv_std = jax.lax.rsqrt(var + BN_EPS)
    out_ref[...] = gamma_ref[...] * (centered * inv_std) + beta_ref[...]


def encoder_forward(features_nhwc, w_t, b, gamma, beta, *,
                    block_n=None, vmem_limit_bytes=None):
    """features_nhwc: (N, H, W, C) backbone output (NHWC; bf16 preferred).

    The feature map is streamed with whatever dtype it arrives in (no separate
    cast/transpose pass).  `b` (linear bias) is accepted for interface parity
    with the PyTorch module but is mathematically cancelled by the train-mode
    BatchNorm and never loaded.  Returns (N, embed_size) float32.
    """
    del b  # exactly cancelled by BN's batch-mean subtraction
    N, H, W, C = features_nhwc.shape
    E = w_t.shape[1]
    HW = H * W

    # (N, H, W, C) -> (N, HW, C): collapses adjacent middle dims — free reshape.
    x = features_nhwc.reshape(N, HW, C)

    # Lane-dense output: pad the embedding dim to a multiple of 128 so every
    # per-tile store is an unmasked full-lane vst.  Padding columns carry zero
    # weight / gamma / beta and are sliced off at the end.
    E_pad = max(128, _round_up(E, 128))
    w = w_t.astype(jnp.bfloat16)                      # resident bf16 MXU path
    g = gamma.reshape(1, E).astype(jnp.float32)
    bt = beta.reshape(1, E).astype(jnp.float32)
    if E_pad != E:
        w = jnp.pad(w, ((0, 0), (0, E_pad - E)))
        g = jnp.pad(g, ((0, 0), (0, E_pad - E)))
        bt = jnp.pad(bt, ((0, 0), (0, E_pad - E)))

    # Batch tile: multiple of 8 sublanes.  32-64 rows keeps the double-buffered
    # bf16 x tiles (block_n * roundup(HW,16) * roundup(C,128) * 2B each) inside
    # scoped VMEM at real ResNet shapes (C=2048, HW=49) on v5e/v6e/v7x while the
    # per-tile DMA stays well above the ~0.35us per-grid-step overhead.
    if block_n is None:
        block_n = N
        for cand in (64, 56, 48, 40, 32, 24, 16, 8):
            if cand <= N and N % cand == 0:
                block_n = cand
                break
    assert N % block_n == 0, "batch must be divisible by block_n (pad if needed)"
    assert block_n == N or block_n % 8 == 0, "block_n must be a multiple of 8"

    # Scoped-VMEM budget: 2x streamed x tiles (sublane/lane padded), a single
    # resident W buffer, 2x per-tile outputs, plus headroom.
    x_item = jnp.dtype(x.dtype).itemsize
    sub = 8 * max(1, 4 // x_item)                     # 8 (f32) / 16 (bf16)
    x_tile_bytes = block_n * _round_up(HW, sub) * _round_up(C, 128) * x_item
    w_bytes = _round_up(C, 16) * E_pad * 2
    y_tile_bytes = block_n * E_pad * 4
    needed = 2 * x_tile_bytes + w_bytes + 2 * y_tile_bytes
    if vmem_limit_bytes is None:
        vmem_limit_bytes = max(int(needed * 1.5) + (4 << 20), 32 << 20)

    # --- Kernel 1: streamed pool + linear (batch-parallel) -------------------
    y = pl.pallas_call(
        pool_linear_kernel,
        out_shape=jax.ShapeDtypeStruct((N, E_pad), jnp.float32),
        grid=(N // block_n,),
        in_specs=[
            # Streamed, double-buffered feature-map tiles (keep default depth 2;
            # spare VMEM goes to a larger block_n, not deeper buffering).
            pl.BlockSpec((block_n, HW, C), lambda i: (i, 0, 0)),
            # Resident weight: constant index_map -> single-buffered.
            pl.BlockSpec((C, E_pad), lambda i: (0, 0),
                         pipeline_mode=pl.Buffered(1)),
        ],
        out_specs=pl.BlockSpec((block_n, E_pad), lambda i: (i, 0)),
        compiler_params=pltpu.CompilerParams(
            # Grid steps are fully independent (no resident accumulator), so the
            # batch axis can be sharded across TensorCores (v7x megacore).
            dimension_semantics=("parallel",),
            vmem_limit_bytes=vmem_limit_bytes,
        ),
    )(x, w)

    # --- Kernel 2: tiny BatchNorm1d over the (N, E_pad) linear output --------
    out = pl.pallas_call(
        batchnorm_kernel,
        out_shape=jax.ShapeDtypeStruct((N, E_pad), jnp.float32),
        grid=(1,),
        in_specs=[
            pl.BlockSpec((N, E_pad), lambda i: (0, 0)),
            pl.BlockSpec((1, E_pad), lambda i: (0, 0)),
            pl.BlockSpec((1, E_pad), lambda i: (0, 0)),
        ],
        out_specs=pl.BlockSpec((N, E_pad), lambda i: (0, 0)),
    )(y, g, bt)

    if E_pad != E:
        out = out[:, :E]
    return out


def reference_forward(features_nhwc, w_t, b, gamma, beta):
    """Pure-JAX reference of the original math (mean-pool + bias + train-BN)."""
    x = features_nhwc.astype(jnp.float32)
    feats = jnp.mean(x, axis=(1, 2))                            # (N, C)
    y = feats @ w_t.astype(jnp.float32) + b[None, :]
    mean = jnp.mean(y, axis=0, keepdims=True)
    var = jnp.mean((y - mean) ** 2, axis=0, keepdims=True)
    return gamma[None, :] * (y - mean) / jnp.sqrt(var + BN_EPS) + beta[None, :]


if __name__ == "__main__":
    # Small proxy shapes (real ResNet-152: C=2048, H=W=7).  batch=16 with
    # block_n=8 exercises the batch grid; H=W=7 mirrors the real spatial extent
    # (so the bf16 first-level pool path runs); C and E are multiples of 128.
    N, H, W, C = 16, 7, 7, 256
    EMBED = 128

    key = jax.random.PRNGKey(0)
    k_img, k_w, k_b, k_g, k_bt = jax.random.split(key, 5)

    # Backbone feature map as the TPU conv stack would emit it: NHWC, bf16.
    features = jax.random.normal(k_img, (N, H, W, C), dtype=jnp.float32)
    features = features.astype(jnp.bfloat16)

    w_t = jax.random.normal(k_w, (C, EMBED), dtype=jnp.float32) / jnp.sqrt(C)
    b = jax.random.normal(k_b, (EMBED,), dtype=jnp.float32) * 0.01
    gamma = 1.0 + 0.1 * jax.random.normal(k_g, (EMBED,), dtype=jnp.float32)
    beta = 0.05 * jax.random.normal(k_bt, (EMBED,), dtype=jnp.float32)

    out = encoder_forward(features, w_t, b, gamma, beta, block_n=8)
    out = jax.block_until_ready(out)

    # Reference keeps the mean-pool scale and the linear bias: verifies that the
    # BN-invariance simplifications in the kernel are exact (up to bf16 rounding).
    ref = reference_forward(features, w_t, b, gamma, beta)

    assert out.shape == (N, EMBED), out.shape
    max_err = float(jnp.max(jnp.abs(out - ref)))
    assert jnp.allclose(out, ref, atol=3e-2, rtol=3e-2), max_err
    print("KERNEL_OK")
</pallas_src>

<mosaic_0001>
module attributes {stable_mosaic.version = 11 : i64} {
  func.func @pool_linear_kernel(%arg0: i32, %arg1: memref<8x49x256xbf16, #tpu.memory_space<vmem>>, %arg2: memref<256x128xbf16, #tpu.memory_space<vmem>>, %arg3: memref<8x128xf32, #tpu.memory_space<vmem>>) attributes {dimension_semantics = [#tpu.dimension_semantics<parallel>], iteration_bounds = array<i64: 2>, scalar_prefetch = 0 : i64, scratch_operands = 0 : i64, tpu.core_type = #tpu.core_type<tc>, window_params = [{transform_indices = @transform_0, window_bounds = array<i64: 8, 49, 256>}, {pipeline_mode = #tpu.pipeline_mode<synchronous>, transform_indices = @transform_1, window_bounds = array<i64: 256, 128>}, {transform_indices = @transform_2, window_bounds = array<i64: 8, 128>}]} {
    %c0 = arith.constant 0 : index
    %c0_0 = arith.constant 0 : index
    %c0_1 = arith.constant 0 : index
    %0 = vector.load %arg1[%c0, %c0_0, %c0_1] : memref<8x49x256xbf16, #tpu.memory_space<vmem>>, vector<8x49x256xbf16>
    %1 = vector.extract_strided_slice %0 {offsets = [0, 0, 0], sizes = [8, 24, 256], strides = [1, 1, 1]} : vector<8x49x256xbf16> to vector<8x24x256xbf16>
    %2 = vector.extract_strided_slice %0 {offsets = [0, 24, 0], sizes = [8, 24, 256], strides = [1, 1, 1]} : vector<8x49x256xbf16> to vector<8x24x256xbf16>
    %3 = arith.addf %1, %2 : vector<8x24x256xbf16>
    %4 = arith.extf %3 : vector<8x24x256xbf16> to vector<8x24x256xf32>
    %cst = arith.constant dense<0.000000e+00> : vector<8x256xf32>
    %5 = vector.multi_reduction <add>, %4, %cst [1] : vector<8x24x256xf32> to vector<8x256xf32>
    %6 = vector.extract_strided_slice %0 {offsets = [0, 48, 0], sizes = [8, 1, 256], strides = [1, 1, 1]} : vector<8x49x256xbf16> to vector<8x1x256xbf16>
    %7 = arith.extf %6 : vector<8x1x256xbf16> to vector<8x1x256xf32>
    %cst_2 = arith.constant dense<0.000000e+00> : vector<8x256xf32>
    %8 = vector.multi_reduction <add>, %7, %cst_2 [1] : vector<8x1x256xf32> to vector<8x256xf32>
    %9 = arith.addf %5, %8 : vector<8x256xf32>
    %10 = arith.truncf %9 : vector<8x256xf32> to vector<8x256xbf16>
    %c0_3 = arith.constant 0 : index
    %c0_4 = arith.constant 0 : index
    %11 = vector.load %arg2[%c0_3, %c0_4] : memref<256x128xbf16, #tpu.memory_space<vmem>>, vector<256x128xbf16>
    %cst_5 = arith.constant dense<0.000000e+00> : vector<8x128xf32>
    %12 = tpu.matmul %10, %11, %cst_5 {dimension_numbers = #tpu.dot_dimension_numbers<[1], [0], [0], [1], [0, 0, 1, 1], [], []>} : vector<8x256xbf16>, vector<256x128xbf16>, vector<8x128xf32> -> vector<8x128xf32>
    %c0_6 = arith.constant 0 : index
    %c0_7 = arith.constant 0 : index
    %13 = vector.load %arg3[%c0_6, %c0_7] : memref<8x128xf32, #tpu.memory_space<vmem>>, vector<8x128xf32>
    tpu.vector_store %arg3[%c0_6, %c0_7], %12 {strides = array<i32>} : memref<8x128xf32, #tpu.memory_space<vmem>>, vector<8x128xf32>,
    return
  }
  func.func @transform_0(%arg0: i32) -> (i32, i32, i32) {
    %c0_i32 = arith.constant 0 : i32
    %c0_i32_0 = arith.constant 0 : i32
    %c0_i32_1 = arith.constant 0 : i32
    return %arg0, %c0_i32, %c0_i32_0 : i32, i32, i32
  }
  func.func @transform_1(%arg0: i32) -> (i32, i32) {
    %c0_i32 = arith.constant 0 : i32
    %c0_i32_0 = arith.constant 0 : i32
    %c0_i32_1 = arith.constant 0 : i32
    return %c0_i32, %c0_i32_0 : i32, i32
  }
  func.func @transform_2(%arg0: i32) -> (i32, i32) {
    %c0_i32 = arith.constant 0 : i32
    %c0_i32_0 = arith.constant 0 : i32
    return %arg0, %c0_i32 : i32, i32
  }
}

</mosaic_0001>

<llo_original>
// kernel: tpu_custom_call.1
$region0: #{tpu_custom_call.1}
  #allocation0 [shape = 'u32[]', space=smem, size = 0x4, offset = 0x4, fixed_abs, tag = 'smem constant byte address 0x4 - core index']
  #allocation1 [shape = 'u32[144,128]{1,0:T(1,128)}', space=vmem, size = 0x12000, scoped, tag = 'internal scratch']
  %s0 = inlined_call_operand.vmem [shape: bf16[16,49,256], index: 0, kind: input, shape index: {}]
  %s1 = inlined_call_operand.vmem [shape: bf16[256,128], index: 1, kind: input, shape index: {}]
  %s2 = inlined_call_operand.hbm [shape: f32[16,128], index: 2, kind: output, shape index: {}]
  %s3 = sld [smem:[#allocation0]]
  $region41: #{tpu_custom_call.1} parent=0
    _
  %s5 = ssub.s32 1, %s3
  %s6 = scalar_select 0, %s5, %s3
  $region1: #{tpu_custom_call.1} parent=0
    #allocation2 [shape = 'u8[8192]{0}', space=vmem, size = 0x2000, scoped, tag = 'output window, operand 0']
    #allocation3 [shape = 's32[2]{0}', space=sflag, size = 0x8, scoped, tag = 'scoped memory for tpu_custom_call.1']
    %7 = vsyncpa [#allocation3], 0
    %s8 = scalar_lea.sflag [#allocation3], 1
    %9 = vsyncpa %s8, 0
    loop: start=0, step=1, limit=4
    $region2: #{tpu_custom_call.1} parent=1 // loop_pre_header
      _
    $region3: #{tpu_custom_call.1} parent=1 // loop_header
      %s11 = sphi 0, %s15
      %p12 = scmp.ge.s32.totalorder %s11, 4
      %s21 = sphi 0, %s23
      %s24 = sphi 0, %s21
      %s25 = sphi 0, %s24
      %s41 = sphi 0, %s25
      %s45 = sphi 0, %s45
      %s47 = sphi 0, %s45
      %s48 = sphi 0, %s47
      %s62 = sphi 0, %s48
      %s68 = sphi 0, %s70
      %s71 = sphi 0, %s68
      %s72 = sphi 0, %s71
      %s88 = sphi 0, %s72
    $region4: #{tpu_custom_call.1} parent=1 // loop_header_branch
      %14 = sbr.rel (%p12) target = $region8
    $region5: #{tpu_custom_call.1} parent=1 // loop_body
      %s16 = ssub.s32 %s11, 1
      %s17 = ssub.s32 %s11, 2
      %s18 = sadd.s32 %s11, 1
      %s19 = ssub.s32 %s11, %s18
      %p20 = scmp.eq.s32.totalorder %s19, 0
      %s22 = sadd.s32 %s21, 1
      %s23 = scalar_select %p20, %s21, %s22
      %p26 = pneg %p20
      %p27 = scmp.eq.s32.totalorder %s11, 1
      %p28 = por %p26, %p27
      %p29 = scmp.ne.s32.totalorder %s21, %s24
      %p30 = scmp.eq.s32.totalorder %s11, 0
      %p31 = por %p29, %p30
      %p32 = scmp.ne.s32.totalorder %s21, %s24
      %p33 = scmp.eq.s32.totalorder %s16, 1
      %p34 = por %p32, %p33
      %p35 = scmp.ne.s32.totalorder %s24, %s25
      %p36 = scmp.eq.s32.totalorder %s16, 0
      %p37 = por %p35, %p36
      %p38 = scmp.ne.s32.totalorder %s24, %s25
      %p39 = scmp.eq.s32.totalorder %s17, 1
      %p40 = por %p38, %p39
      %p42 = scmp.ne.s32.totalorder %s25, %s41
      %p43 = scmp.eq.s32.totalorder %s17, 0
      %p44 = por %p42, %p43
      %s46 = sadd.s32 %s45, 1
      %p49 = scmp.eq.s32.totalorder %s11, 1
      %p50 = scmp.ne.s32.totalorder %s45, %s47
      %p51 = scmp.eq.s32.totalorder %s11, 0
      %p52 = por %p50, %p51
      %p53 = scmp.ne.s32.totalorder %s45, %s47
      %p54 = scmp.eq.s32.totalorder %s16, 1
      %p55 = por %p53, %p54
      %p56 = scmp.ne.s32.totalorder %s47, %s48
      %p57 = scmp.eq.s32.totalorder %s16, 0
      %p58 = por %p56, %p57
      %p59 = scmp.ne.s32.totalorder %s47, %s48
      %p60 = scmp.eq.s32.totalorder %s17, 1
      %p61 = por %p59, %p60
      %p63 = scmp.ne.s32.totalorder %s48, %s62
      %p64 = scmp.eq.s32.totalorder %s17, 0
      %p65 = por %p63, %p64
      %s66 = ssub.s32 %s11, %s18
      %p67 = scmp.eq.s32.totalorder %s66, 0
      %s69 = sadd.s32 %s68, 1
      %s70 = scalar_select %p67, %s68, %s69
      %p73 = pneg %p67
      %p74 = scmp.eq.s32.totalorder %s11, 1
      %p75 = por %p73, %p74
      %p76 = scmp.ne.s32.totalorder %s68, %s71
      %p77 = scmp.eq.s32.totalorder %s11, 0
      %p78 = por %p76, %p77
      %p79 = scmp.ne.s32.totalorder %s68, %s71
      %p80 = scmp.eq.s32.totalorder %s16, 1
      %p81 = por %p79, %p80
      %p82 = scmp.ne.s32.totalorder %s71, %s72
      %p83 = scmp.eq.s32.totalorder %s16, 0
      %p84 = por %p82, %p83
      %p85 = scmp.ne.s32.totalorder %s71, %s72
      %p86 = scmp.eq.s32.totalorder %s17, 1
      %p87 = por %p85, %p86
      %p89 = scmp.ne.s32.totalorder %s72, %s88
      %p90 = scmp.eq.s32.totalorder %s17, 0
      %p91 = por %p89, %p90
      %p92 = scmp.le.s32.totalorder 1, %s11
      %p93 = scmp.lt.s32.totalorder %s11, 3
      %p94 = pnand %p92, %p93
      %p95 = pneg %p94
      // Predicated region
      $region9: #{tpu_custom_call.1} parent=5 // pred_check
        _
      $region10: #{tpu_custom_call.1} parent=5 // pred_check_branch
        %97 = sbr.rel (%p94) target = $region12
      $region11: #{tpu_custom_call.1} parent=5 // pred_region
        %s98 = ssub.s32 %s11, 1
        // Predicated region
        $region13: #{tpu_custom_call.1} parent=11 // pred_check
          %p99 = pneg %p58
        $region14: #{tpu_custom_call.1} parent=11 // pred_check_branch
          %101 = sbr.rel (%p99) target = $region16
        $region15: #{tpu_custom_call.1} parent=11 // pred_region
          _
        $region16: #{tpu_custom_call.1} parent=11 // pred_fallthru
          _
      $region12: #{tpu_custom_call.1} parent=5 // pred_fallthru
        _
      %p102 = scmp.lt.s32.totalorder %s11, 2
      // Predicated region
      $region17: #{tpu_custom_call.1} parent=5 // pred_check
        %p103 = pneg %p102
      $region18: #{tpu_custom_call.1} parent=5 // pred_check_branch
        %105 = sbr.rel (%p103) target = $region20
      $region19: #{tpu_custom_call.1} parent=5 // pred_region
        // Predicated region
        $region21: #{tpu_custom_call.1} parent=19 // pred_check
          %p106 = pneg %p31
        $region22: #{tpu_custom_call.1} parent=19 // pred_check_branch
          %108 = sbr.rel (%p106) target = $region24
        $region23: #{tpu_custom_call.1} parent=19 // pred_region
          %s109 = smul.u32 8, %s11
          %p110 = scmp.lt.s32.totalorder %s109, 15
          %s111 = scalar_select %p110, %s109, 15
          %s112 = smul.addr %s111, 14
          %s113 = smul.addr %s112, 4
          %s114 = scalar_lea.vmem %s0, %s113
          %s115 = smul.u32 8, %s11
        $region24: #{tpu_custom_call.1} parent=19 // pred_fallthru
          _
      $region20: #{tpu_custom_call.1} parent=5 // pred_fallthru
        _
      %p116 = scmp.le.s32.totalorder 1, %s11
      %p117 = scmp.lt.s32.totalorder %s11, 3
      %p118 = pnand %p116, %p117
      %p119 = pneg %p118
      // Predicated region
      $region25: #{tpu_custom_call.1} parent=5 // pred_check
        _
      $region26: #{tpu_custom_call.1} parent=5 // pred_check_branch
        %121 = sbr.rel (%p118) target = $region28
      $region27: #{tpu_custom_call.1} parent=5 // pred_region
        %s122 = ssub.s32 %s11, 1
        %s123 = smul.u32 8, %s16
        %p124 = scmp.lt.s32.totalorder %s123, 15
        %s125 = scalar_select %p124, %s123, 15
        %s126 = smul.addr %s125, 14
        %s127 = smul.addr %s126, 4
        %s128 = scalar_lea.vmem %s0, %s127
        %p129 = pneg %p37
        %p130 = pneg %p34
        %p131 = pneg %p58
        %p132 = pneg %p55
        %p133 = pneg %p84
        %p134 = pneg %p81
        %s135 = sand.u32 %s71, 1
        %s136 = scalar_lea.sflag [#allocation3], %s135
        %s137 = sand.u32 %s71, 1
        %s138 = smul.addr %s137, 8
        %s139 = scalar_lea.vmem [#allocation2], %s138
        %s140 = smul.u32 8, %s16
        %p141 = scmp.lt.s32.totalorder %s140, 15
        %s142 = scalar_select %p141, %s140, 15
        %s143 = smul.addr %s142, 14
        %s144 = smul.addr %s143, 4
        %s145 = scalar_lea.vmem %s0, %s144
        %s146 = smul.u32 8, %s16
        %v148 = vld [vmem:[%s145] sm:$0xff]
        %v149 = vld [vmem:[%s145 + $0x8] sm:$0xff]
        %v150 = vld [vmem:[%s145 + $0x10] sm:$0xff]
        %v151 = vld [vmem:[%s145 + $0x18] sm:$0xff]
        %v152 = vld [vmem:[%s145 + $0x20] sm:$0xff]
        %v153 = vld [vmem:[%s145 + $0x28] sm:$0xff]
        %v154 = vld [vmem:[%s145 + $0x30] sm:$0x11]
        %v155 = vld [vmem:[%s145 + $0x38] sm:$0xff]
        %v156 = vld [vmem:[%s145 + $0x40] sm:$0xff]
        %v157 = vld [vmem:[%s145 + $0x48] sm:$0xff]
        %v158 = vld [vmem:[%s145 + $0x50] sm:$0xff]
        %v159 = vld [vmem:[%s145 + $0x58] sm:$0xff]
        %v160 = vld [vmem:[%s145 + $0x60] sm:$0xff]
        %v161 = vld [vmem:[%s145 + $0x68] sm:$0x11]
        %v162 = vld [vmem:[%s145 + $0x70] sm:$0xff]
        %v163 = vld [vmem:[%s145 + $0x78] sm:$0xff]
        %v164 = vld [vmem:[%s145 + $0x80] sm:$0xff]
        %v165 = vld [vmem:[%s145 + $0x88] sm:$0xff]
        %v166 = vld [vmem:[%s145 + $0x90] sm:$0xff]
        %v167 = vld [vmem:[%s145 + $0x98] sm:$0xff]
        %v168 = vld [vmem:[%s145 + $0xa0] sm:$0x11]
        %v169 = vld [vmem:[%s145 + $0xa8] sm:$0xff]
        %v170 = vld [vmem:[%s145 + $0xb0] sm:$0xff]
        %v171 = vld [vmem:[%s145 + $0xb8] sm:$0xff]
        %v172 = vld [vmem:[%s145 + $0xc0] sm:$0xff]
        %v173 = vld [vmem:[%s145 + $0xc8] sm:$0xff]
        %v174 = vld [vmem:[%s145 + $0xd0] sm:$0xff]
        %v175 = vld [vmem:[%s145 + $0xd8] sm:$0x11]
        %v176 = vld [vmem:[%s145 + $0xe0] sm:$0xff]
        %v177 = vld [vmem:[%s145 + $0xe8] sm:$0xff]
        %v178 = vld [vmem:[%s145 + $0xf0] sm:$0xff]
        %v179 = vld [vmem:[%s145 + $0xf8] sm:$0xff]
        %v180 = vld [vmem:[%s145 + $0x100] sm:$0xff]
        %v181 = vld [vmem:[%s145 + $0x108] sm:$0xff]
        %v182 = vld [vmem:[%s145 + $0x110] sm:$0x11]
        %v183 = vld [vmem:[%s145 + $0x118] sm:$0xff]
        %v184 = vld [vmem:[%s145 + $0x120] sm:$0xff]
        %v185 = vld [vmem:[%s145 + $0x128] sm:$0xff]
        %v186 = vld [vmem:[%s145 + $0x130] sm:$0xff]
        %v187 = vld [vmem:[%s145 + $0x138] sm:$0xff]
        %v188 = vld [vmem:[%s145 + $0x140] sm:$0xff]
        %v189 = vld [vmem:[%s145 + $0x148] sm:$0x11]
        %v190 = vld [vmem:[%s145 + $0x150] sm:$0xff]
        %v191 = vld [vmem:[%s145 + $0x158] sm:$0xff]
        %v192 = vld [vmem:[%s145 + $0x160] sm:$0xff]
        %v193 = vld [vmem:[%s145 + $0x168] sm:$0xff]
        %v194 = vld [vmem:[%s145 + $0x170] sm:$0xff]
        %v195 = vld [vmem:[%s145 + $0x178] sm:$0xff]
        %v196 = vld [vmem:[%s145 + $0x180] sm:$0x11]
        %v197 = vld [vmem:[%s145 + $0x188] sm:$0xff]
        %v198 = vld [vmem:[%s145 + $0x190] sm:$0xff]
        %v199 = vld [vmem:[%s145 + $0x198] sm:$0xff]
        %v200 = vld [vmem:[%s145 + $0x1a0] sm:$0xff]
        %v201 = vld [vmem:[%s145 + $0x1a8] sm:$0xff]
        %v202 = vld [vmem:[%s145 + $0x1b0] sm:$0xff]
        %v203 = vld [vmem:[%s145 + $0x1b8] sm:$0x11]
        %v204 = vadd.bf16 %v148, %v151
        %v205 = vadd.bf16 %v149, %v152
        %v206 = vadd.bf16 %v150, %v153
        %v207 = vadd.bf16 %v155, %v158
        %v208 = vadd.bf16 %v156, %v159
        %v209 = vadd.bf16 %v157, %v160
        %v210 = vadd.bf16 %v162, %v165
        %v211 = vadd.bf16 %v163, %v166
        %v212 = vadd.bf16 %v164, %v167
        %v213 = vadd.bf16 %v169, %v172
        %v214 = vadd.bf16 %v170, %v173
        %v215 = vadd.bf16 %v171, %v174
        %v216 = vadd.bf16 %v176, %v179
        %v217 = vadd.bf16 %v177, %v180
        %v218 = vadd.bf16 %v178, %v181
        %v219 = vadd.bf16 %v183, %v186
        %v220 = vadd.bf16 %v184, %v187
        %v221 = vadd.bf16 %v185, %v188
        %v222 = vadd.bf16 %v190, %v193
        %v223 = vadd.bf16 %v191, %v194
        %v224 = vadd.bf16 %v192, %v195
        %v225 = vadd.bf16 %v197, %v200
        %v226 = vadd.bf16 %v198, %v201
        %v227 = vadd.bf16 %v199, %v202
        %v228 = vunpack.c.l.bf16 %v204
        %v229 = vunpack.c.h.bf16 %v204
        %v230 = vunpack.c.l.bf16 %v205
        %v231 = vunpack.c.h.bf16 %v205
        %v232 = vunpack.c.l.bf16 %v206
        %v233 = vunpack.c.h.bf16 %v206
        %v234 = vunpack.c.l.bf16 %v207
        %v235 = vunpack.c.h.bf16 %v207
        %v236 = vunpack.c.l.bf16 %v208
        %v237 = vunpack.c.h.bf16 %v208
        %v238 = vunpack.c.l.bf16 %v209
        %v239 = vunpack.c.h.bf16 %v209
        %v240 = vunpack.c.l.bf16 %v210
        %v241 = vunpack.c.h.bf16 %v210
        %v242 = vunpack.c.l.bf16 %v211
        %v243 = vunpack.c.h.bf16 %v211
        %v244 = vunpack.c.l.bf16 %v212
        %v245 = vunpack.c.h.bf16 %v212
        %v246 = vunpack.c.l.bf16 %v213
        %v247 = vunpack.c.h.bf16 %v213
        %v248 = vunpack.c.l.bf16 %v214
        %v249 = vunpack.c.h.bf16 %v214
        %v250 = vunpack.c.l.bf16 %v215
        %v251 = vunpack.c.h.bf16 %v215
        %v252 = vunpack.c.l.bf16 %v216
        %v253 = vunpack.c.h.bf16 %v216
        %v254 = vunpack.c.l.bf16 %v217
        %v255 = vunpack.c.h.bf16 %v217
        %v256 = vunpack.c.l.bf16 %v218
        %v257 = vunpack.c.h.bf16 %v218
        %v258 = vunpack.c.l.bf16 %v219
        %v259 = vunpack.c.h.bf16 %v219
        %v260 = vunpack.c.l.bf16 %v220
        %v261 = vunpack.c.h.bf16 %v220
        %v262 = vunpack.c.l.bf16 %v221
        %v263 = vunpack.c.h.bf16 %v221
        %v264 = vunpack.c.l.bf16 %v222
        %v265 = vunpack.c.h.bf16 %v222
        %v266 = vunpack.c.l.bf16 %v223
        %v267 = vunpack.c.h.bf16 %v223
        %v268 = vunpack.c.l.bf16 %v224
        %v269 = vunpack.c.h.bf16 %v224
        %v270 = vunpack.c.l.bf16 %v225
        %v271 = vunpack.c.h.bf16 %v225
        %v272 = vunpack.c.l.bf16 %v226
        %v273 = vunpack.c.h.bf16 %v226
        %v274 = vunpack.c.l.bf16 %v227
        %v275 = vunpack.c.h.bf16 %v227
        %v276 = vadd.f32 %v228, %v230
        %v277 = vadd.f32 %v276, %v232
        %v278 = vrot.slane %v277, 4
        %v279 = vadd.f32 %v277, %v278
        %v280 = vrot.slane %v279, 2
        %v281 = vadd.f32 %v279, %v280
        %v282 = vrot.slane %v281, 1
        %v283 = vadd.f32 %v281, %v282
        %v284 = vadd.f32 %v229, %v231
        %v285 = vadd.f32 %v284, %v233
        %v286 = vrot.slane %v285, 4
        %v287 = vadd.f32 %v285, %v286
        %v288 = vrot.slane %v287, 2
        %v289 = vadd.f32 %v287, %v288
        %v290 = vrot.slane %v289, 1
        %v291 = vadd.f32 %v289, %v290
        %v292 = vadd.f32 %v234, %v236
        %v293 = vadd.f32 %v292, %v238
        %v294 = vrot.slane %v293, 4
        %v295 = vadd.f32 %v293, %v294
        %v296 = vrot.slane %v295, 2
        %v297 = vadd.f32 %v295, %v296
        %v298 = vrot.slane %v297, 1
        %v299 = vadd.f32 %v297, %v298
        %v300 = vadd.f32 %v235, %v237
        %v301 = vadd.f32 %v300, %v239
        %v302 = vrot.slane %v301, 4
        %v303 = vadd.f32 %v301, %v302
        %v304 = vrot.slane %v303, 2
        %v305 = vadd.f32 %v303, %v304
        %v306 = vrot.slane %v305, 1
        %v307 = vadd.f32 %v305, %v306
        %v308 = vadd.f32 %v240, %v242
        %v309 = vadd.f32 %v308, %v244
        %v310 = vrot.slane %v309, 4
        %v311 = vadd.f32 %v309, %v310
        %v312 = vrot.slane %v311, 2
        %v313 = vadd.f32 %v311, %v312
        %v314 = vrot.slane %v313, 1
        %v315 = vadd.f32 %v313, %v314
        %v316 = vadd.f32 %v241, %v243
        %v317 = vadd.f32 %v316, %v245
        %v318 = vrot.slane %v317, 4
        %v319 = vadd.f32 %v317, %v318
        %v320 = vrot.slane %v319, 2
        %v321 = vadd.f32 %v319, %v320
        %v322 = vrot.slane %v321, 1
        %v323 = vadd.f32 %v321, %v322
        %v324 = vadd.f32 %v246, %v248
        %v325 = vadd.f32 %v324, %v250
        %v326 = vrot.slane %v325, 4
        %v327 = vadd.f32 %v325, %v326
        %v328 = vrot.slane %v327, 2
        %v329 = vadd.f32 %v327, %v328
        %v330 = vrot.slane %v329, 1
        %v331 = vadd.f32 %v329, %v330
        %v332 = vadd.f32 %v247, %v249
        %v333 = vadd.f32 %v332, %v251
        %v334 = vrot.slane %v333, 4
        %v335 = vadd.f32 %v333, %v334
        %v336 = vrot.slane %v335, 2
        %v337 = vadd.f32 %v335, %v336
        %v338 = vrot.slane %v337, 1
        %v339 = vadd.f32 %v337, %v338
        %v340 = vadd.f32 %v252, %v254
        %v341 = vadd.f32 %v340, %v256
        %v342 = vrot.slane %v341, 4
        %v343 = vadd.f32 %v341, %v342
        %v344 = vrot.slane %v343, 2
        %v345 = vadd.f32 %v343, %v344
        %v346 = vrot.slane %v345, 1
        %v347 = vadd.f32 %v345, %v346
        %v348 = vadd.f32 %v253, %v255
        %v349 = vadd.f32 %v348, %v257
        %v350 = vrot.slane %v349, 4
        %v351 = vadd.f32 %v349, %v350
        %v352 = vrot.slane %v351, 2
        %v353 = vadd.f32 %v351, %v352
        %v354 = vrot.slane %v353, 1
        %v355 = vadd.f32 %v353, %v354
        %v356 = vadd.f32 %v258, %v260
        %v357 = vadd.f32 %v356, %v262
        %v358 = vrot.slane %v357, 4
        %v359 = vadd.f32 %v357, %v358
        %v360 = vrot.slane %v359, 2
        %v361 = vadd.f32 %v359, %v360
        %v362 = vrot.slane %v361, 1
        %v363 = vadd.f32 %v361, %v362
        %v364 = vadd.f32 %v259, %v261
        %v365 = vadd.f32 %v364, %v263
        %v366 = vrot.slane %v365, 4
        %v367 = vadd.f32 %v365, %v366
        %v368 = vrot.slane %v367, 2
        %v369 = vadd.f32 %v367, %v368
        %v370 = vrot.slane %v369, 1
        %v371 = vadd.f32 %v369, %v370
        %v372 = vadd.f32 %v264, %v266
        %v373 = vadd.f32 %v372, %v268
        %v374 = vrot.slane %v373, 4
        %v375 = vadd.f32 %v373, %v374
        %v376 = vrot.slane %v375, 2
        %v377 = vadd.f32 %v375, %v376
        %v378 = vrot.slane %v377, 1
        %v379 = vadd.f32 %v377, %v378
        %v380 = vadd.f32 %v265, %v267
        %v381 = vadd.f32 %v380, %v269
        %v382 = vrot.slane %v381, 4
        %v383 = vadd.f32 %v381, %v382
        %v384 = vrot.slane %v383, 2
        %v385 = vadd.f32 %v383, %v384
        %v386 = vrot.slane %v385, 1
        %v387 = vadd.f32 %v385, %v386
        %v388 = vadd.f32 %v270, %v272
        %v389 = vadd.f32 %v388, %v274
        %v390 = vrot.slane %v389, 4
        %v391 = vadd.f32 %v389, %v390
        %v392 = vrot.slane %v391, 2
        %v393 = vadd.f32 %v391, %v392
        %v394 = vrot.slane %v393, 1
        %v395 = vadd.f32 %v393, %v394
        %v396 = vadd.f32 %v271, %v273
        %v397 = vadd.f32 %v396, %v275
        %v398 = vrot.slane %v397, 4
        %v399 = vadd.f32 %v397, %v398
        %v400 = vrot.slane %v399, 2
        %v401 = vadd.f32 %v399, %v400
        %v402 = vrot.slane %v401, 1
        %v403 = vadd.f32 %v401, %v402
        %v404 = vunpack.c.l.bf16 %v154
        %v405 = vunpack.c.h.bf16 %v154
        %v406 = vunpack.c.l.bf16 %v161
        %v407 = vunpack.c.h.bf16 %v161
        %v408 = vunpack.c.l.bf16 %v168
        %v409 = vunpack.c.h.bf16 %v168
        %v410 = vunpack.c.l.bf16 %v175
        %v411 = vunpack.c.h.bf16 %v175
        %v412 = vunpack.c.l.bf16 %v182
        %v413 = vunpack.c.h.bf16 %v182
        %v414 = vunpack.c.l.bf16 %v189
        %v415 = vunpack.c.h.bf16 %v189
        %v416 = vunpack.c.l.bf16 %v196
        %v417 = vunpack.c.h.bf16 %v196
        %v418 = vunpack.c.l.bf16 %v203
        %v419 = vunpack.c.h.bf16 %v203
        %v420 = vadd.f32 %v404, 0.0
        %v421 = vadd.f32 %v405, 0.0
        %v422 = vadd.f32 %v406, 0.0
        %v423 = vadd.f32 %v407, 0.0
        %v424 = vadd.f32 %v408, 0.0
        %v425 = vadd.f32 %v409, 0.0
        %v426 = vadd.f32 %v410, 0.0
        %v427 = vadd.f32 %v411, 0.0
        %v428 = vadd.f32 %v412, 0.0
        %v429 = vadd.f32 %v413, 0.0
        %v430 = vadd.f32 %v414, 0.0
        %v431 = vadd.f32 %v415, 0.0
        %v432 = vadd.f32 %v416, 0.0
        %v433 = vadd.f32 %v417, 0.0
        %v434 = vadd.f32 %v418, 0.0
        %v435 = vadd.f32 %v419, 0.0
        %v436 = vadd.f32 %v283, %v420
        %v437 = vadd.f32 %v291, %v421
        %v438 = vadd.f32 %v299, %v422
        %v439 = vadd.f32 %v307, %v423
        %v440 = vadd.f32 %v315, %v424
        %v441 = vadd.f32 %v323, %v425
        %v442 = vadd.f32 %v331, %v426
        %v443 = vadd.f32 %v339, %v427
        %v444 = vadd.f32 %v347, %v428
        %v445 = vadd.f32 %v355, %v429
        %v446 = vadd.f32 %v363, %v430
        %v447 = vadd.f32 %v371, %v431
        %v448 = vadd.f32 %v379, %v432
        %v449 = vadd.f32 %v387, %v433
        %v450 = vadd.f32 %v395, %v434
        %v451 = vadd.f32 %v403, %v435
        %v452 = vpack.c.bf16 %v436, %v436
        %v453 = vpack.c.bf16 %v437, %v437
        %v454 = vpack.c.bf16 %v438, %v438
        %v455 = vpack.c.bf16 %v439, %v439
        %v456 = vpack.c.bf16 %v440, %v440
        %v457 = vpack.c.bf16 %v441, %v441
        %v458 = vpack.c.bf16 %v442, %v442
        %v459 = vpack.c.bf16 %v443, %v443
        %v460 = vpack.c.bf16 %v444, %v444
        %v461 = vpack.c.bf16 %v445, %v445
        %v462 = vpack.c.bf16 %v446, %v446
        %v463 = vpack.c.bf16 %v447, %v447
        %v464 = vpack.c.bf16 %v448, %v448
        %v465 = vpack.c.bf16 %v449, %v449
        %v466 = vpack.c.bf16 %v450, %v450
        %v467 = vpack.c.bf16 %v451, %v451
        %v468 = vld [vmem:[%s1] sm:$0xf]
        %v469 = vld [vmem:[%s1 + $0x4] sm:$0xf]
        %v470 = vld [vmem:[%s1 + $0x8] sm:$0xf]
        %v471 = vld [vmem:[%s1 + $0xc] sm:$0xf]
        %v472 = vld [vmem:[%s1 + $0x10] sm:$0xf]
        %v473 = vld [vmem:[%s1 + $0x14] sm:$0xf]
        %v474 = vld [vmem:[%s1 + $0x18] sm:$0xf]
        %v475 = vld [vmem:[%s1 + $0x1c] sm:$0xf]
        %v476 = vld [vmem:[%s1 + $0x20] sm:$0xf]
        %v477 = vld [vmem:[%s1 + $0x24] sm:$0xf]
        %v478 = vld [vmem:[%s1 + $0x28] sm:$0xf]
        %v479 = vld [vmem:[%s1 + $0x2c] sm:$0xf]
        %v480 = vld [vmem:[%s1 + $0x30] sm:$0xf]
        %v481 = vld [vmem:[%s1 + $0x34] sm:$0xf]
        %v482 = vld [vmem:[%s1 + $0x38] sm:$0xf]
        %v483 = vld [vmem:[%s1 + $0x3c] sm:$0xf]
        %v484 = vld [vmem:[%s1 + $0x40] sm:$0xf]
        %v485 = vld [vmem:[%s1 + $0x44] sm:$0xf]
        %v486 = vld [vmem:[%s1 + $0x48] sm:$0xf]
        %v487 = vld [vmem:[%s1 + $0x4c] sm:$0xf]
        %v488 = vld [vmem:[%s1 + $0x50] sm:$0xf]
        %v489 = vld [vmem:[%s1 + $0x54] sm:$0xf]
        %v490 = vld [vmem:[%s1 + $0x58] sm:$0xf]
        %v491 = vld [vmem:[%s1 + $0x5c] sm:$0xf]
        %v492 = vld [vmem:[%s1 + $0x60] sm:$0xf]
        %v493 = vld [vmem:[%s1 + $0x64] sm:$0xf]
        %v494 = vld [vmem:[%s1 + $0x68] sm:$0xf]
        %v495 = vld [vmem:[%s1 + $0x6c] sm:$0xf]
        %v496 = vld [vmem:[%s1 + $0x70] sm:$0xf]
        %v497 = vld [vmem:[%s1 + $0x74] sm:$0xf]
        %v498 = vld [vmem:[%s1 + $0x78] sm:$0xf]
        %v499 = vld [vmem:[%s1 + $0x7c] sm:$0xf]
        %v516 = vunpack.c.l.b16 %v452
        %v517 = vunpack.c.l.b16 %v453
        %v518 = vunpack.c.l.b16 %v454
        %v519 = vunpack.c.l.b16 %v455
        %v520 = vunpack.c.l.b16 %v456
        %v521 = vunpack.c.l.b16 %v457
        %v522 = vunpack.c.l.b16 %v458
        %v523 = vunpack.c.l.b16 %v459
        %v524 = vunpack.c.l.b16 %v460
        %v525 = vunpack.c.l.b16 %v461
        %v526 = vunpack.c.l.b16 %v462
        %v527 = vunpack.c.l.b16 %v463
        %v528 = vunpack.c.l.b16 %v464
        %v529 = vunpack.c.l.b16 %v465
        %v530 = vunpack.c.l.b16 %v466
        %v531 = vunpack.c.l.b16 %v467
        %v532 = vrot.slane %v518, 7
        %vm533 = vcmask 1041409
        %v534 = vsel %vm533, %v532, %v516
        %v535 = vrot.slane %v520, 6
        %vm536 = vcmask 1042434
        %v537 = vsel %vm536, %v535, %v534
        %v538 = vrot.slane %v522, 5
        %vm539 = vcmask 1043459
        %v540 = vsel %vm539, %v538, %v537
        %v541 = vrot.slane %v524, 4
        %vm542 = vcmask 1044484
        %v543 = vsel %vm542, %v541, %v540
        %v544 = vrot.slane %v526, 3
        %vm545 = vcmask 1045509
        %v546 = vsel %vm545, %v544, %v543
        %v547 = vrot.slane %v528, 2
        %vm548 = vcmask 1046534
        %v549 = vsel %vm548, %v547, %v546
        %v550 = vrot.slane %v530, 1
        %vm551 = vcmask 1047559
        %v552 = vsel %vm551, %v550, %v549
        %v553 = vrot.slane %v519, 7
        %v554 = vsel %vm533, %v553, %v517
        %v555 = vrot.slane %v521, 6
        %v556 = vsel %vm536, %v555, %v554
        %v557 = vrot.slane %v523, 5
        %v558 = vsel %vm539, %v557, %v556
        %v559 = vrot.slane %v525, 4
        %v560 = vsel %vm542, %v559, %v558
        %v561 = vrot.slane %v527, 3
        %v562 = vsel %vm545, %v561, %v560
        %v563 = vrot.slane %v529, 2
        %v564 = vsel %vm548, %v563, %v562
        %v565 = vrot.slane %v531, 1
        %v566 = vsel %vm551, %v565, %v564
        %v567 = vpack.c.b16 %v552, %v552
        %v568 = vpack.c.b16 %v566, %v566
        %v603 = vunpack.c.l.b16 %v468
        %v604 = vunpack.c.l.b16 %v469
        %v605 = vunpack.c.l.b16 %v470
        %v606 = vunpack.c.l.b16 %v471
        %v607 = vunpack.c.l.b16 %v472
        %v608 = vunpack.c.l.b16 %v473
        %v609 = vunpack.c.l.b16 %v474
        %v610 = vunpack.c.l.b16 %v475
        %v611 = vunpack.c.l.b16 %v476
        %v612 = vunpack.c.l.b16 %v477
        %v613 = vunpack.c.l.b16 %v478
        %v614 = vunpack.c.l.b16 %v479
        %v615 = vunpack.c.l.b16 %v480
        %v616 = vunpack.c.l.b16 %v481
        %v617 = vunpack.c.l.b16 %v482
        %v618 = vunpack.c.l.b16 %v483
        %v619 = vunpack.c.l.b16 %v484
        %v620 = vunpack.c.l.b16 %v485
        %v621 = vunpack.c.l.b16 %v486
        %v622 = vunpack.c.l.b16 %v487
        %v623 = vunpack.c.l.b16 %v488
        %v624 = vunpack.c.l.b16 %v489
        %v625 = vunpack.c.l.b16 %v490
        %v626 = vunpack.c.l.b16 %v491
        %v627 = vunpack.c.l.b16 %v492
        %v628 = vunpack.c.l.b16 %v493
        %v629 = vunpack.c.l.b16 %v494
        %v630 = vunpack.c.l.b16 %v495
        %v631 = vunpack.c.l.b16 %v496
        %v632 = vunpack.c.l.b16 %v497
        %v633 = vunpack.c.l.b16 %v498
        %v634 = vunpack.c.l.b16 %v499
        %v635 = vpack.c.b16 %v604, %v603
        %v636 = vpack.c.b16 %v606, %v605
        %v637 = vpack.c.b16 %v608, %v607
        %v638 = vpack.c.b16 %v610, %v609
        %v639 = vpack.c.b16 %v612, %v611
        %v640 = vpack.c.b16 %v614, %v613
        %v641 = vpack.c.b16 %v616, %v615
        %v642 = vpack.c.b16 %v618, %v617
        %v643 = vpack.c.b16 %v620, %v619
        %v644 = vpack.c.b16 %v622, %v621
        %v645 = vpack.c.b16 %v624, %v623
        %v646 = vpack.c.b16 %v626, %v625
        %v647 = vpack.c.b16 %v628, %v627
        %v648 = vpack.c.b16 %v630, %v629
        %v649 = vpack.c.b16 %v632, %v631
        %v650 = vpack.c.b16 %v634, %v633
        %667 = vmatprep.subr.bf16.mxu0 0
        %668 = vmatpush1.bf16.msra.mxu0 %v635
        %669 = vmatprep.subr.bf16.mxu0 0
        %670 = vmatpush1.bf16.msra.mxu0 %v636
        %671 = vmatprep.subr.bf16.mxu0 0
        %672 = vmatpush1.bf16.msra.mxu0 %v637
        %673 = vmatprep.subr.bf16.mxu0 0
        %674 = vmatpush1.bf16.msra.mxu0 %v638
        %675 = vmatprep.subr.bf16.mxu0 0
        %676 = vmatpush1.bf16.msra.mxu0 %v639
        %677 = vmatprep.subr.bf16.mxu0 0
        %678 = vmatpush1.bf16.msra.mxu0 %v640
        %679 = vmatprep.subr.bf16.mxu0 0
        %680 = vmatpush1.bf16.msra.mxu0 %v641
        %681 = vmatprep.subr.bf16.mxu0 0
        %682 = vmatpush1.bf16.msra.mxu0 %v642
        %683 = vmatprep.subr.bf16.mxu0 0
        %684 = vmatpush1.bf16.msra.mxu0 %v643
        %685 = vmatprep.subr.bf16.mxu0 0
        %686 = vmatpush1.bf16.msra.mxu0 %v644
        %687 = vmatprep.subr.bf16.mxu0 0
        %688 = vmatpush1.bf16.msra.mxu0 %v645
        %689 = vmatprep.subr.bf16.mxu0 0
        %690 = vmatpush1.bf16.msra.mxu0 %v646
        %691 = vmatprep.subr.bf16.mxu0 0
        %692 = vmatpush1.bf16.msra.mxu0 %v647
        %693 = vmatprep.subr.bf16.mxu0 0
        %694 = vmatpush1.bf16.msra.mxu0 %v648
        %695 = vmatprep.subr.bf16.mxu0 0
        %696 = vmatpush1.bf16.msra.mxu0 %v649
        %697 = vmatprep.subr.bf16.mxu0 0
        %698 = vmatpush1.bf16.msra.mxu0 %v650
        %699 = vmatprep.mubr.bf16.mxu0 %v568
        %700 = vmatmul.mubr.bf16.gmra.mrb[0].mxu0 %v567
        %v701 = vpop.f32.mrb[0].mxu0
        %v702 = vadd.f32 0.0, %v701
        %v703 = vpop.f32.mrb[0].mxu0
        %v704 = vpop.f32.mrb[0].mxu0
        %v705 = vpop.f32.mrb[0].mxu0
        %706 = vdwg.mxu0
        %707 = vst [vmem:[%s139] sm:$0xff] %v702
        %s708 = sand.u32 %s71, 1
        %s709 = scalar_lea.sflag [#allocation3], %s708
        %s710 = sand.u32 %s71, 1
        %s711 = smul.addr %s710, 8
        %s712 = scalar_lea.vmem [#allocation2], %s711
        // Predicated region
        $region29: #{tpu_custom_call.1} parent=27 // pred_check
          %p713 = pneg %p81
        $region30: #{tpu_custom_call.1} parent=27 // pred_check_branch
          %715 = sbr.rel (%p713) target = $region32
        $region31: #{tpu_custom_call.1} parent=27 // pred_region
          %s717 = ssub.s32 128, 128
          %718 = vsyncadd %s709, %s717
          %s719 = smul.addr %s16, 128
          %s720 = scalar_lea.hbm %s2, %s719
          %s722 = sshll.u32 %s712, 4
          %s723 = int_to_ptr.vmem [resolvable:$true] %s722
          %725 = dma.vmem_to_hbm [thread:$0]  %s723, 128, %s720, %s709
        $region32: #{tpu_custom_call.1} parent=27 // pred_fallthru
          _
      $region28: #{tpu_custom_call.1} parent=5 // pred_fallthru
        _
      %p726 = scmp.le.s32.totalorder 2, %s11
      // Predicated region
      $region33: #{tpu_custom_call.1} parent=5 // pred_check
        %p727 = pneg %p726
      $region34: #{tpu_custom_call.1} parent=5 // pred_check_branch
        %729 = sbr.rel (%p727) target = $region36
      $region35: #{tpu_custom_call.1} parent=5 // pred_region
        %s730 = ssub.s32 %s11, 2
        // Predicated region
        $region37: #{tpu_custom_call.1} parent=35 // pred_check
          %p731 = pneg %p87
        $region38: #{tpu_custom_call.1} parent=35 // pred_check_branch
          %733 = sbr.rel (%p731) target = $region40
        $region39: #{tpu_custom_call.1} parent=35 // pred_region
          %s734 = sand.u32 %s72, 1
          %s735 = scalar_lea.sflag [#allocation3], %s734
          %s736 = sand.u32 %s72, 1
          %s737 = smul.addr %s736, 8
          %s738 = scalar_lea.vmem [#allocation2], %s737
          %739 = dma.done %s735, 128
        $region40: #{tpu_custom_call.1} parent=35 // pred_fallthru
          _
      $region36: #{tpu_custom_call.1} parent=5 // pred_fallthru
        _
    $region6: #{tpu_custom_call.1} parent=1 // loop_footer
      %s15 = sadd.s32 1, %s11
    $region7: #{tpu_custom_call.1} parent=1 // loop_footer_branch
      %10 = sbr.rel target = $region3
    $region8: #{tpu_custom_call.1} parent=1 // loop_exit
      _
    %740 = vsyncpa [#allocation3], 1
    %s741 = scalar_lea.sflag [#allocation3], 1
    %742 = vsyncpa %s741, 1

</llo_original>
